<compile_context>
chip_gen: v6e
topology: v6e:2x2x1
jax: 0.10.0
libtpu: 0.0.40
codegen_flags: <defaults>
</compile_context>

<pallas_src>
import math

import jax
import jax.numpy as jnp
from jax.experimental import pallas as pl
from jax.experimental.pallas import tpu as pltpu


# ----------------------------------------------------------------------------
# Helpers
# ----------------------------------------------------------------------------
def _round_up(x, m):
    return ((x + m - 1) // m) * m


def _vmem_capacity_bytes():
    try:
        return int(pltpu.get_tpu_info().vmem_capacity_bytes)
    except Exception:
        return 64 << 20  # conservative: v7x per-TC VMEM


def _pick_block(dim, cap, candidates):
    """Pick a block size <= cap (multiple of 128) minimizing padding of dim."""
    best = None
    for c in candidates:
        if c > cap:
            continue
        pad = _round_up(dim, c) - dim
        if best is None or pad < best[1] or (pad == best[1] and c > best[0]):
            best = (c, pad)
    return best[0] if best is not None else 128


def _pick_block_m(B, bm_max):
    best = None
    for c in (512, 384, 256, 128):
        if c > bm_max:
            continue
        pad = _round_up(B, c) - B
        if best is None or pad < best[1] or (pad == best[1] and c > best[0]):
            best = (c, pad)
    return best[0] if best is not None else 128


# ----------------------------------------------------------------------------
# Kernels
# ----------------------------------------------------------------------------
# ---- single-K-block fast path (common case: Din is a few hundred) ----------
def _linear_1k_bias_kernel(x_ref, w_ref, b_ref, o_ref):
    acc = jnp.dot(x_ref[...], w_ref[...], preferred_element_type=jnp.float32)
    o_ref[...] = (acc + b_ref[...]).astype(o_ref.dtype)


def _linear_1k_nobias_kernel(x_ref, w_ref, o_ref):
    o_ref[...] = jnp.dot(x_ref[...], w_ref[...],
                         preferred_element_type=jnp.float32).astype(o_ref.dtype)


# ---- general K reduction: f32 accumulator, bias folded into k==0 init ------
def _linear_acc_bias_kernel(x_ref, w_ref, b_ref, o_ref, acc_ref):
    @pl.when(pl.program_id(2) == 0)
    def _():
        acc_ref[...] = jnp.broadcast_to(b_ref[...], acc_ref.shape)

    acc_ref[...] += jnp.dot(x_ref[...], w_ref[...],
                            preferred_element_type=jnp.float32)

    @pl.when(pl.program_id(2) == pl.num_programs(2) - 1)
    def _():
        o_ref[...] = acc_ref[...].astype(o_ref.dtype)


def _linear_acc_nobias_kernel(x_ref, w_ref, o_ref, acc_ref):
    @pl.when(pl.program_id(2) == 0)
    def _():
        acc_ref[...] = jnp.zeros_like(acc_ref)

    acc_ref[...] += jnp.dot(x_ref[...], w_ref[...],
                            preferred_element_type=jnp.float32)

    @pl.when(pl.program_id(2) == pl.num_programs(2) - 1)
    def _():
        o_ref[...] = acc_ref[...].astype(o_ref.dtype)


# ----------------------------------------------------------------------------
# One-time parameter prep (call at module init, NOT per forward):
# transpose W to (Din, F), cast to compute dtype, pad to lane-dense tiles.
# ----------------------------------------------------------------------------
def prepare_zh_linear_params(weight, bias=None, *, bk_max=1024, bn_max=256,
                             compute_dtype=jnp.bfloat16):
    """weight: (F, Din) in PyTorch nn.Linear layout; bias: (F,) or None.

    compute_dtype: dtype streamed into the MXU (bf16 default; accumulation is
    always f32).  Pass None to keep the weight's own dtype (e.g. exact f32).
    # TODO(synk): int8 (v5e/v6e) / fp8 (v7x) weight quantization for the
    # memory-bound small-M regime.
    """
    F, Din = weight.shape
    w_t = weight.T                      # hoisted transpose (one-time cost)
    if compute_dtype is not None:
        w_t = w_t.astype(compute_dtype)

    # K (contraction) tiling: single block when it fits, else minimal padding.
    K128 = _round_up(Din, 128)
    if K128 <= bk_max:
        bk, K_pad = K128, K128
    else:
        bk = _pick_block(K128, bk_max, (1024, 768, 512, 384, 256, 128))
        K_pad = _round_up(K128, bk)

    # N (output feature) tiling: a single j block when small so each x tile is
    # DMA'd exactly once; otherwise minimal-pad block <= bn_max.
    N128 = _round_up(F, 128)
    if N128 <= max(bn_max, 512):
        bn, N_pad = N128, N128
    else:
        bn = _pick_block(N128, bn_max, (512, 384, 256, 128))
        N_pad = _round_up(N128, bn)

    w_t = jnp.pad(w_t, ((0, K_pad - Din), (0, N_pad - F)))   # zero pad: exact
    b = None
    if bias is not None:
        b = jnp.pad(bias.astype(jnp.float32), (0, N_pad - F)).reshape(1, N_pad)

    return dict(w_t=w_t, bias=b, in_features=Din, out_features=F,
                bk=bk, bn=bn, K_pad=K_pad, N_pad=N_pad,
                compute_dtype=compute_dtype)


# ----------------------------------------------------------------------------
# Forward
# ----------------------------------------------------------------------------
def zh_to_model_state(z, h, params=None, *, bm_max=512,
                      force_pallas=False, xla_fallback_flops=1 << 22):
    """z: (..., L0, L1), h: (..., Dh).  params from prepare_zh_linear_params
    or None (concat-only path, matching out_features=None in the module)."""
    *batch, L0, L1 = z.shape
    Dz = L0 * L1
    z_flat = z.reshape(*batch, Dz)
    out_dtype = jnp.result_type(z.dtype, h.dtype)

    if params is None:
        # Concat-only path stays in XLA: already HBM-roofline, nothing to fuse.
        return jnp.concatenate([z_flat, h], axis=-1).astype(out_dtype)

    Din = params["in_features"]
    F = params["out_features"]
    Dh = Din - Dz
    assert h.shape[-1] == Dh, (h.shape, Dz, Din)
    K_pad, N_pad = params["K_pad"], params["N_pad"]
    bk, bn = params["bk"], params["bn"]
    w_t, b = params["w_t"], params["bias"]
    cd = params["compute_dtype"]

    B = 1
    for d in batch:
        B *= d
    z2 = z_flat.reshape(B, Dz)
    h2 = h.reshape(B, Dh)

    # Tiny-problem fallback: single sub-tile GEMM — let XLA fuse
    # concat + matmul + bias instead of paying the custom-call overhead.
    if (not force_pallas) and 2 * B * Din * F < xla_fallback_flops:
        zh = jnp.concatenate([z2, h2], axis=-1)
        if cd is not None:
            zh = zh.astype(cd)
        out = jnp.dot(zh, w_t[:Din, :F], preferred_element_type=jnp.float32)
        if b is not None:
            out = out + b[0, :F]
        return out.astype(out_dtype).reshape(*batch, F)

    # M tiling: minimize padded rows (single block whenever it fits).
    M8 = _round_up(B, 8)
    if M8 <= bm_max:
        bm, M_pad = M8, M8
    else:
        bm = _pick_block_m(B, bm_max)
        M_pad = _round_up(B, bm)

    # Megacore: guarantee >=2 parallel (i, j) blocks when possible so a
    # 2-TC chip (v7x) doesn't leave one TensorCore idle.
    if (M_pad // bm) * (N_pad // bn) == 1:
        if bn >= 256 and bn % 256 == 0:
            bn //= 2
        elif bm >= 16 and bm % 16 == 0:
            bm //= 2
            M_pad = _round_up(B, bm)

    # Build the padded, compute-dtype activation in ONE fused pass:
    # concat(z | h | K-pad zeros), then row-pad to M_pad.  Zero pad is exact.
    xcd = cd if cd is not None else out_dtype
    parts = [z2.astype(xcd), h2.astype(xcd)]
    if K_pad > Din:
        parts.append(jnp.zeros((B, K_pad - Din), xcd))
    x = jnp.concatenate(parts, axis=-1)
    if M_pad > B:
        x = jnp.pad(x, ((0, M_pad - B), (0, 0)))

    x_isz = jnp.dtype(x.dtype).itemsize
    w_isz = jnp.dtype(w_t.dtype).itemsize
    o_isz = jnp.dtype(out_dtype).itemsize
    n_k = K_pad // bk

    # VMEM budget: double-buffered x/w(+bias) tiles + double-buffered output
    # + f32 accumulator (multi-K only), clamped to half the chip's capacity.
    tile_bytes = (2 * (bm * bk * x_isz + bk * bn * w_isz)
                  + 2 * bm * bn * o_isz
                  + (bm * bn * 4 if n_k > 1 else 0)
                  + (2 * bn * 4 if b is not None else 0))
    vmem_cap = _vmem_capacity_bytes()
    vmem_limit = int(min(max(2 * tile_bytes, 8 << 20), vmem_cap // 2))

    cost = pl.CostEstimate(
        flops=2 * M_pad * K_pad * N_pad,
        transcendentals=0,
        bytes_accessed=int(M_pad * K_pad * x_isz + K_pad * N_pad * w_isz
                           + M_pad * N_pad * o_isz
                           + (N_pad * 4 if b is not None else 0)),
    )

    if n_k == 1:
        # Fast path: no K reduction axis, no accumulator scratch.
        grid = (M_pad // bm, N_pad // bn)
        x_spec = pl.BlockSpec((bm, bk), lambda i, j: (i, 0))
        w_spec = pl.BlockSpec((bk, bn), lambda i, j: (0, j))
        o_spec = pl.BlockSpec((bm, bn), lambda i, j: (i, j))
        if b is not None:
            kernel = _linear_1k_bias_kernel
            in_specs = [x_spec, w_spec,
                        pl.BlockSpec((1, bn), lambda i, j: (0, j))]
            args = (x, w_t, b)
        else:
            kernel = _linear_1k_nobias_kernel
            in_specs = [x_spec, w_spec]
            args = (x, w_t)
        scratch = []
        dims = ("parallel", "parallel")
    else:
        grid = (M_pad // bm, N_pad // bn, n_k)
        x_spec = pl.BlockSpec((bm, bk), lambda i, j, k: (i, k))
        w_spec = pl.BlockSpec((bk, bn), lambda i, j, k: (k, j))
        o_spec = pl.BlockSpec((bm, bn), lambda i, j, k: (i, j))
        if b is not None:
            kernel = _linear_acc_bias_kernel
            in_specs = [x_spec, w_spec,
                        pl.BlockSpec((1, bn), lambda i, j, k: (0, j))]
            args = (x, w_t, b)
        else:
            kernel = _linear_acc_nobias_kernel
            in_specs = [x_spec, w_spec]
            args = (x, w_t)
        scratch = [pltpu.VMEM((bm, bn), jnp.float32)]
        dims = ("parallel", "parallel", "arbitrary")

    out_pad = pl.pallas_call(
        kernel,
        out_shape=jax.ShapeDtypeStruct((M_pad, N_pad), out_dtype),
        grid_spec=pltpu.PrefetchScalarGridSpec(
            num_scalar_prefetch=0,
            grid=grid,
            in_specs=in_specs,
            out_specs=o_spec,
            scratch_shapes=scratch,
        ),
        compiler_params=pltpu.CompilerParams(
            dimension_semantics=dims,
            vmem_limit_bytes=vmem_limit,
        ),
        cost_estimate=cost,
    )(*args)

    return out_pad[:B, :F].reshape(*batch, F)


# ----------------------------------------------------------------------------
# Demo / self-check
# ----------------------------------------------------------------------------
if __name__ == "__main__":
    key = jax.random.PRNGKey(0)
    keys = jax.random.split(key, 8)
    k_z, k_h, k_w, k_b, k_z2, k_h2, k_w2, k_b2 = keys

    # ---- Test 1: module shapes, f32 compute (exact), bias, Pallas forced ----
    B, L0, L1, H = 8, 4, 8, 32
    Dz, D_in, F = L0 * L1, L0 * L1 + H, 48

    z = jax.random.normal(k_z, (B, L0, L1), dtype=jnp.float32)
    h = jax.random.normal(k_h, (B, H), dtype=jnp.float32)
    bound = 1.0 / math.sqrt(D_in)
    weight = jax.random.uniform(k_w, (F, D_in), minval=-bound, maxval=bound,
                                dtype=jnp.float32)
    bias = jax.random.uniform(k_b, (F,), minval=-bound, maxval=bound,
                              dtype=jnp.float32)

    zh_ref = jnp.concatenate([z.reshape(B, Dz), h], axis=-1)
    ref = zh_ref @ weight.T + bias

    params_f32 = prepare_zh_linear_params(weight, bias, compute_dtype=None)
    out = jax.block_until_ready(zh_to_model_state(z, h, params_f32,
                                                  force_pallas=True))
    assert out.shape == (B, F)
    assert jnp.allclose(out, ref, atol=1e-4, rtol=1e-4)

    # bias=None -> bias-free kernel variant (f32, exact)
    params_nb = prepare_zh_linear_params(weight, None, compute_dtype=None)
    out_nb = jax.block_until_ready(zh_to_model_state(z, h, params_nb,
                                                     force_pallas=True))
    assert jnp.allclose(out_nb, zh_ref @ weight.T, atol=1e-4, rtol=1e-4)

    # ---- Test 2: multi-K accumulator path + j axis (bias folded into init) --
    B2, L02, L12, H2, F2 = 16, 8, 20, 32, 200
    Dz2, Din2 = L02 * L12, L02 * L12 + H2          # 160, 192
    z2 = jax.random.normal(k_z2, (B2, L02, L12), dtype=jnp.float32)
    h2 = jax.random.normal(k_h2, (B2, H2), dtype=jnp.float32)
    bound2 = 1.0 / math.sqrt(Din2)
    w2 = jax.random.uniform(k_w2, (F2, Din2), minval=-bound2, maxval=bound2,
                            dtype=jnp.float32)
    b2 = jax.random.uniform(k_b2, (F2,), minval=-bound2, maxval=bound2,
                            dtype=jnp.float32)
    params2 = prepare_zh_linear_params(w2, b2, bk_max=128, compute_dtype=None)
    out2 = jax.block_until_ready(zh_to_model_state(z2, h2, params2,
                                                   force_pallas=True))
    zh2_ref = jnp.concatenate([z2.reshape(B2, Dz2), h2], axis=-1)
    ref2 = zh2_ref @ w2.T + b2
    assert out2.shape == (B2, F2)
    assert jnp.allclose(out2, ref2, atol=1e-4, rtol=1e-4)

    # ---- Test 3: bf16 default compute dtype (f32 accumulation) --------------
    params_bf16 = prepare_zh_linear_params(w2, b2)          # default bf16
    out3 = jax.block_until_ready(zh_to_model_state(z2, h2, params_bf16,
                                                   force_pallas=True))
    zh2_bf = zh2_ref.astype(jnp.bfloat16).astype(jnp.float32)
    w2_bf = w2.astype(jnp.bfloat16).astype(jnp.float32)
    ref3 = zh2_bf @ w2_bf.T + b2
    assert out3.shape == (B2, F2)
    assert jnp.allclose(out3, ref3, atol=1e-2, rtol=1e-2)

    # ---- Test 4: no-linear (concat-only) path --------------------------------
    out_cat = jax.block_until_ready(zh_to_model_state(z, h))
    assert out_cat.shape == (B, D_in)
    assert jnp.allclose(out_cat, zh_ref, atol=1e-6, rtol=1e-6)

    # ---- Test 5: tiny-problem XLA fallback + arbitrary leading batch dims ----
    z5 = z.reshape(2, 4, L0, L1)
    h5 = h.reshape(2, 4, H)
    out5 = jax.block_until_ready(zh_to_model_state(z5, h5, params_f32))
    assert out5.shape == (2, 4, F)
    assert jnp.allclose(out5.reshape(B, F), ref, atol=1e-4, rtol=1e-4)

    print("KERNEL_OK")
</pallas_src>

<mosaic_0001>
module attributes {stable_mosaic.version = 11 : i64} {
  func.func @_linear_1k_bias_kernel(%arg0: i32, %arg1: i32, %arg2: memref<8x128xf32, #tpu.memory_space<vmem>>, %arg3: memref<128x128xf32, #tpu.memory_space<vmem>>, %arg4: memref<1x128xf32, #tpu.memory_space<vmem>>, %arg5: memref<8x128xf32, #tpu.memory_space<vmem>>) attributes {dimension_semantics = [#tpu.dimension_semantics<parallel>, #tpu.dimension_semantics<parallel>], iteration_bounds = array<i64: 1, 1>, scalar_prefetch = 0 : i64, scratch_operands = 0 : i64, tpu.core_type = #tpu.core_type<tc>, window_params = [{transform_indices = @transform_0, window_bounds = array<i64: 8, 128>}, {transform_indices = @transform_1, window_bounds = array<i64: 128, 128>}, {transform_indices = @transform_2, window_bounds = array<i64: 1, 128>}, {transform_indices = @transform_3, window_bounds = array<i64: 8, 128>}]} {
    %c0 = arith.constant 0 : index
    %c0_0 = arith.constant 0 : index
    %0 = vector.load %arg2[%c0, %c0_0] : memref<8x128xf32, #tpu.memory_space<vmem>>, vector<8x128xf32>
    %c0_1 = arith.constant 0 : index
    %c0_2 = arith.constant 0 : index
    %1 = vector.load %arg3[%c0_1, %c0_2] : memref<128x128xf32, #tpu.memory_space<vmem>>, vector<128x128xf32>
    %cst = arith.constant dense<0.000000e+00> : vector<8x128xf32>
    %2 = tpu.matmul %0, %1, %cst {dimension_numbers = #tpu.dot_dimension_numbers<[1], [0], [0], [1], [0, 0, 1, 1], [], []>} : vector<8x128xf32>, vector<128x128xf32>, vector<8x128xf32> -> vector<8x128xf32>
    %c0_3 = arith.constant 0 : index
    %c0_4 = arith.constant 0 : index
    %3 = vector.load %arg4[%c0_3, %c0_4] : memref<1x128xf32, #tpu.memory_space<vmem>>, vector<1x128xf32>
    %4 = vector.broadcast %3 : vector<1x128xf32> to vector<8x128xf32>
    %5 = arith.addf %2, %4 : vector<8x128xf32>
    %c0_5 = arith.constant 0 : index
    %c0_6 = arith.constant 0 : index
    %6 = vector.load %arg5[%c0_5, %c0_6] : memref<8x128xf32, #tpu.memory_space<vmem>>, vector<8x128xf32>
    tpu.vector_store %arg5[%c0_5, %c0_6], %5 {strides = array<i32>} : memref<8x128xf32, #tpu.memory_space<vmem>>, vector<8x128xf32>,
    return
  }
  func.func @transform_0(%arg0: i32, %arg1: i32) -> (i32, i32) {
    %c0_i32 = arith.constant 0 : i32
    %c0_i32_0 = arith.constant 0 : i32
    return %arg0, %c0_i32 : i32, i32
  }
  func.func @transform_1(%arg0: i32, %arg1: i32) -> (i32, i32) {
    %c0_i32 = arith.constant 0 : i32
    %c0_i32_0 = arith.constant 0 : i32
    return %c0_i32, %arg1 : i32, i32
  }
  func.func @transform_2(%arg0: i32, %arg1: i32) -> (i32, i32) {
    %c0_i32 = arith.constant 0 : i32
    %c0_i32_0 = arith.constant 0 : i32
    return %c0_i32, %arg1 : i32, i32
  }
  func.func @transform_3(%arg0: i32, %arg1: i32) -> (i32, i32) {
    %c0_i32 = arith.constant 0 : i32
    return %arg0, %arg1 : i32, i32
  }
}

</mosaic_0001>

<llo_original>
// kernel: tpu_custom_call.1
$region0: #{tpu_custom_call.1}
  #allocation0 [shape = 'u32[]', space=smem, size = 0x4, offset = 0x4, fixed_abs, tag = 'smem constant byte address 0x4 - core index']
  #allocation1 [shape = 'u32[144,128]{1,0:T(1,128)}', space=vmem, size = 0x12000, scoped, tag = 'internal scratch']
  %s0 = inlined_call_operand.hbm [shape: f32[8,128], index: 0, kind: input, shape index: {}]
  %s1 = inlined_call_operand.hbm [shape: f32[128,128], index: 1, kind: input, shape index: {}]
  %s2 = inlined_call_operand.vmem [shape: f32[1,128], index: 2, kind: input, shape index: {}]
  %s3 = inlined_call_operand.hbm [shape: f32[8,128], index: 3, kind: output, shape index: {}]
  %s4 = sld [smem:[#allocation0]]
  $region30: #{tpu_custom_call.1} parent=0
    _
  %s6 = ssub.s32 1, %s4
  %s7 = scalar_select 0, %s6, %s4
  $region1: #{tpu_custom_call.1} parent=0
    #allocation2 [shape = 'u8[4096]{0}', space=vmem, size = 0x1000, scoped, tag = 'input window, operand 0, single buffered']
    #allocation3 [shape = 's32[1]{0}', space=sflag, size = 0x4, scoped, tag = 'scoped memory for tpu_custom_call.1']
    #allocation4 [shape = 's32[1]{0}', space=sflag, size = 0x4, scoped, tag = 'scoped memory for tpu_custom_call.1']
    #allocation5 [shape = 'u8[65536]{0}', space=vmem, size = 0x10000, scoped, tag = 'input window, operand 1, single buffered']
    #allocation6 [shape = 's32[1]{0}', space=sflag, size = 0x4, scoped, tag = 'scoped memory for tpu_custom_call.1']
    #allocation7 [shape = 'u8[4096]{0}', space=vmem, size = 0x1000, scoped, tag = 'output window, operand 0, single buffered']
    %8 = vsyncpa [#allocation3], 0
    %9 = vsyncpa [#allocation6], 0
    %10 = vsyncpa [#allocation4], 0
    // Predicated region
    $region2: #{tpu_custom_call.1} parent=1 // pred_check
      _
    $region3: #{tpu_custom_call.1} parent=1 // pred_check_branch
      %12 = sbr.rel (0) target = $region5
    $region4: #{tpu_custom_call.1} parent=1 // pred_region
      %s14 = ssub.s32 128, 128
      %15 = vsyncadd [#allocation3], %s14
      %s17 = sshll.u32 [#allocation2], 4
      %s18 = int_to_ptr.vmem [resolvable:$true] %s17
      %20 = dma.hbm_to_vmem [thread:$0]  %s0, 128, %s18, [#allocation3]
    $region5: #{tpu_custom_call.1} parent=1 // pred_fallthru
      _
    // Predicated region
    $region6: #{tpu_custom_call.1} parent=1 // pred_check
      _
    $region7: #{tpu_custom_call.1} parent=1 // pred_check_branch
      %22 = sbr.rel (0) target = $region9
    $region8: #{tpu_custom_call.1} parent=1 // pred_region
      %s24 = ssub.s32 2048, 2048
      %25 = vsyncadd [#allocation6], %s24
      %s26 = sshll.u32 [#allocation5], 4
      %s27 = int_to_ptr.vmem [resolvable:$true] %s26
      %32 = dma.hbm_to_vmem [thread:$0]  %s1, 2048, %s27, [#allocation6], 128, 128, 8
    $region9: #{tpu_custom_call.1} parent=1 // pred_fallthru
      _
    // Predicated region
    $region10: #{tpu_custom_call.1} parent=1 // pred_check
      _
    $region11: #{tpu_custom_call.1} parent=1 // pred_check_branch
      %34 = sbr.rel (0) target = $region13
    $region12: #{tpu_custom_call.1} parent=1 // pred_region
      _
    $region13: #{tpu_custom_call.1} parent=1 // pred_fallthru
      _
    // Predicated region
    $region14: #{tpu_custom_call.1} parent=1 // pred_check
      _
    $region15: #{tpu_custom_call.1} parent=1 // pred_check_branch
      %36 = sbr.rel (0) target = $region17
    $region16: #{tpu_custom_call.1} parent=1 // pred_region
      %37 = dma.done [#allocation3], 128
    $region17: #{tpu_custom_call.1} parent=1 // pred_fallthru
      _
    // Predicated region
    $region18: #{tpu_custom_call.1} parent=1 // pred_check
      _
    $region19: #{tpu_custom_call.1} parent=1 // pred_check_branch
      %39 = sbr.rel (0) target = $region21
    $region20: #{tpu_custom_call.1} parent=1 // pred_region
      %40 = dma.done [#allocation6], 2048
    $region21: #{tpu_custom_call.1} parent=1 // pred_fallthru
      _
    %v41 = vld [vmem:[#allocation2] sm:$0xff]
    %v42 = vld [vmem:[#allocation5] sm:$0xff]
    %v43 = vld [vmem:[#allocation5 + $0x8] sm:$0xff]
    %v44 = vld [vmem:[#allocation5 + $0x10] sm:$0xff]
    %v45 = vld [vmem:[#allocation5 + $0x18] sm:$0xff]
    %v46 = vld [vmem:[#allocation5 + $0x20] sm:$0xff]
    %v47 = vld [vmem:[#allocation5 + $0x28] sm:$0xff]
    %v48 = vld [vmem:[#allocation5 + $0x30] sm:$0xff]
    %v49 = vld [vmem:[#allocation5 + $0x38] sm:$0xff]
    %v50 = vld [vmem:[#allocation5 + $0x40] sm:$0xff]
    %v51 = vld [vmem:[#allocation5 + $0x48] sm:$0xff]
    %v52 = vld [vmem:[#allocation5 + $0x50] sm:$0xff]
    %v53 = vld [vmem:[#allocation5 + $0x58] sm:$0xff]
    %v54 = vld [vmem:[#allocation5 + $0x60] sm:$0xff]
    %v55 = vld [vmem:[#allocation5 + $0x68] sm:$0xff]
    %v56 = vld [vmem:[#allocation5 + $0x70] sm:$0xff]
    %v57 = vld [vmem:[#allocation5 + $0x78] sm:$0xff]
    %v58 = vld [vmem:[%s2] sm:$0x1]
    %v60 = vlaneseq
    %v61 = vshrl.u32 %v60, 7
    %v62 = vsub.s32 0, %v61
    %v63 = vrot.slane %v58, %v62
    %65 = vmatprep.subr.mxu0 0.0
    %66 = vmatpush1.msra.mxu0 %v57
    %67 = vmatprep.subr.mxu0 0.0
    %68 = vmatpush1.msra.mxu0 %v56
    %69 = vmatprep.subr.mxu0 0.0
    %70 = vmatpush1.msra.mxu0 %v55
    %71 = vmatprep.subr.mxu0 0.0
    %72 = vmatpush1.msra.mxu0 %v54
    %73 = vmatprep.subr.mxu0 0.0
    %74 = vmatpush1.msra.mxu0 %v53
    %75 = vmatprep.subr.mxu0 0.0
    %76 = vmatpush1.msra.mxu0 %v52
    %77 = vmatprep.subr.mxu0 0.0
    %78 = vmatpush1.msra.mxu0 %v51
    %79 = vmatprep.subr.mxu0 0.0
    %80 = vmatpush1.msra.mxu0 %v50
    %81 = vmatprep.subr.mxu0 0.0
    %82 = vmatpush1.msra.mxu0 %v49
    %83 = vmatprep.subr.mxu0 0.0
    %84 = vmatpush1.msra.mxu0 %v48
    %85 = vmatprep.subr.mxu0 0.0
    %86 = vmatpush1.msra.mxu0 %v47
    %87 = vmatprep.subr.mxu0 0.0
    %88 = vmatpush1.msra.mxu0 %v46
    %89 = vmatprep.subr.mxu0 0.0
    %90 = vmatpush1.msra.mxu0 %v45
    %91 = vmatprep.subr.mxu0 0.0
    %92 = vmatpush1.msra.mxu0 %v44
    %93 = vmatprep.subr.mxu0 0.0
    %94 = vmatpush1.msra.mxu0 %v43
    %95 = vmatprep.subr.mxu0 0.0
    %96 = vmatpush1.msra.mxu0 %v42
    %97 = vmatprep.subr.mxu0 0.0
    %98 = vmatpush2.msra.mxu0 0.0
    %99 = vmatprep.subr.mxu0 0.0
    %100 = vmatpush2.msra.mxu0 0.0
    %101 = vmatprep.subr.mxu0 0.0
    %102 = vmatpush2.msra.mxu0 0.0
    %103 = vmatprep.subr.mxu0 0.0
    %104 = vmatpush2.msra.mxu0 0.0
    %105 = vmatprep.subr.mxu0 0.0
    %106 = vmatpush2.msra.mxu0 0.0
    %107 = vmatprep.subr.mxu0 0.0
    %108 = vmatpush2.msra.mxu0 0.0
    %109 = vmatprep.subr.mxu0 0.0
    %110 = vmatpush2.msra.mxu0 0.0
    %111 = vmatprep.subr.mxu0 0.0
    %112 = vmatpush2.msra.mxu0 0.0
    %113 = vmatprep.subr.mxu0 0.0
    %114 = vmatpush2.msra.mxu0 0.0
    %115 = vmatprep.subr.mxu0 0.0
    %116 = vmatpush2.msra.mxu0 0.0
    %117 = vmatprep.subr.mxu0 0.0
    %118 = vmatpush2.msra.mxu0 0.0
    %119 = vmatprep.subr.mxu0 0.0
    %120 = vmatpush2.msra.mxu0 0.0
    %121 = vmatprep.subr.mxu0 0.0
    %122 = vmatpush2.msra.mxu0 0.0
    %123 = vmatprep.subr.mxu0 0.0
    %124 = vmatpush2.msra.mxu0 0.0
    %125 = vmatprep.subr.mxu0 0.0
    %126 = vmatpush2.msra.mxu0 0.0
    %127 = vmatprep.subr.mxu0 0.0
    %128 = vmatpush2.msra.mxu0 0.0
    %129 = vmatprep.mubr.f32.mxu0 0.0
    %130 = vmatmul.mubr.f32.gmra.mxu0 %v41
    %v131 = vpop.f32.mrf.mxu0
    %v132 = vadd.f32 %v63, %v131
    %v133 = vpop.f32.mrf.mxu0
    %134 = vdwg.mxu0
    %135 = vst [vmem:[#allocation7] sm:$0xff] %v132
    // Predicated region
    $region22: #{tpu_custom_call.1} parent=1 // pred_check
      _
    $region23: #{tpu_custom_call.1} parent=1 // pred_check_branch
      %137 = sbr.rel (0) target = $region25
    $region24: #{tpu_custom_call.1} parent=1 // pred_region
      %s139 = ssub.s32 128, 128
      %140 = vsyncadd [#allocation4], %s139
      %s142 = sshll.u32 [#allocation7], 4
      %s143 = int_to_ptr.vmem [resolvable:$true] %s142
      %145 = dma.vmem_to_hbm [thread:$0]  %s143, 128, %s3, [#allocation4]
    $region25: #{tpu_custom_call.1} parent=1 // pred_fallthru
      _
    // Predicated region
    $region26: #{tpu_custom_call.1} parent=1 // pred_check
      _
    $region27: #{tpu_custom_call.1} parent=1 // pred_check_branch
      %147 = sbr.rel (0) target = $region29
    $region28: #{tpu_custom_call.1} parent=1 // pred_region
      %148 = dma.done [#allocation4], 128
    $region29: #{tpu_custom_call.1} parent=1 // pred_fallthru
      _
    %149 = vsyncpa [#allocation3], 1
    %150 = vsyncpa [#allocation6], 1
    %151 = vsyncpa [#allocation4], 1

</llo_original>
